<compile_context>
chip_gen: v6e
topology: v6e:2x2x1
jax: 0.10.0
libtpu: 0.0.40
codegen_flags: <defaults>
</compile_context>

<pallas_src>
import functools

import jax
import jax.numpy as jnp
from jax.experimental import pallas as pl
from jax.experimental.pallas import tpu as pltpu

_LANE = 128
_ROW_CAP = 2048  # multiple of 32 -> valid sublane tiling for f32/bf16/int8 blocks


def _pdl_partial_kernel(tt_ref, ttk_ref, pt_ref, ptk_ref, out_t_ref, out_p_ref,
                        *, tm, valid_rows, needs_mask):
    """One row-tile: per-tile (8, 128) partial sums of |t_t-t_tk| and |p_t-p_tk|."""
    # Load in native dtype (min HBM bytes), upcast in-register.
    td = jnp.abs(tt_ref[...].astype(jnp.float32) - ttk_ref[...].astype(jnp.float32))
    pd = jnp.abs(pt_ref[...].astype(jnp.float32) - ptk_ref[...].astype(jnp.float32))

    if needs_mask:
        # The last grid block overhangs the (rows, 128) array; out-of-bounds rows
        # hold unspecified data and MUST be masked out.
        row = (jax.lax.broadcasted_iota(jnp.int32, td.shape, 0)
               + pl.program_id(0) * tm)
        keep = row < valid_rows
        td = jnp.where(keep, td, 0.0)
        pd = jnp.where(keep, pd, 0.0)

    def partial8(x):
        if tm % 8 == 0:
            # Split along (8,128) tile boundaries: plain vreg adds, no XLU.
            return x.reshape(tm // 8, 8, _LANE).sum(axis=0)
        # Small single-block case (tm == rows, not 8-aligned): one sublane
        # reduce, placed in sublane 0 of the (8, 128) output tile.
        s = jnp.broadcast_to(x.sum(axis=0, keepdims=True), (8, _LANE))
        sub = jax.lax.broadcasted_iota(jnp.int32, (8, _LANE), 0)
        return jnp.where(sub == 0, s, 0.0)

    out_t_ref[...] = partial8(td)[None]
    out_p_ref[...] = partial8(pd)[None]


def _abs_diff_sums(target_t, target_tk, pred_t, pred_tk):
    """Returns (sum|target_t - target_tk|, sum|pred_t - pred_tk|) as f32 scalars."""
    n = target_t.size
    rows = pl.cdiv(n, _LANE)

    def as_slab(x):
        x = x.reshape(-1)                       # free for contiguous arrays
        if rows * _LANE != n:
            # TODO(synk): only when n % 128 != 0 — pays one copy to reach a
            # lane-aligned shape; the zero padding contributes |0-0| = 0.
            x = jnp.pad(x, (0, rows * _LANE - n))
        return x.reshape(rows, _LANE)           # native dtype, no upcast here

    slabs = [as_slab(a) for a in (target_t, target_tk, pred_t, pred_tk)]

    tm = rows if rows <= _ROW_CAP else _ROW_CAP
    grid_m = pl.cdiv(rows, tm)
    needs_mask = (rows % tm) != 0

    in_spec = pl.BlockSpec((tm, _LANE), lambda i: (i, 0))
    out_spec = pl.BlockSpec((1, 8, _LANE), lambda i: (i, 0, 0))

    kernel = functools.partial(_pdl_partial_kernel, tm=tm, valid_rows=rows,
                               needs_mask=needs_mask)

    part_t, part_p = pl.pallas_call(
        kernel,
        out_shape=(
            jax.ShapeDtypeStruct((grid_m, 8, _LANE), jnp.float32),
            jax.ShapeDtypeStruct((grid_m, 8, _LANE), jnp.float32),
        ),
        grid_spec=pltpu.PrefetchScalarGridSpec(
            num_scalar_prefetch=0,
            grid=(grid_m,),
            in_specs=[in_spec, in_spec, in_spec, in_spec],
            out_specs=(out_spec, out_spec),
        ),
        compiler_params=pltpu.CompilerParams(
            dimension_semantics=("parallel",)),
    )(*slabs)

    # Tiny final reduction (grid_m * 1024 f32 values each) in plain JAX.
    return jnp.sum(part_t), jnp.sum(part_p)


@functools.partial(jax.custom_vjp, nondiff_argnums=(4,))
def _pixel_dynamics_loss(target_t, target_tk, pred_t, pred_tk, diff_pp):
    sum_t, sum_p = _abs_diff_sums(target_t, target_tk, pred_t, pred_tk)
    n = jnp.float32(target_t.size)
    if diff_pp:
        # mean(|td| - |pd|) == (sum|td| - sum|pd|) / N
        return ((sum_t - sum_p) / n) ** 2
    return (sum_t / n - sum_p / n) ** 2


def _pdl_fwd(target_t, target_tk, pred_t, pred_tk, diff_pp):
    sum_t, sum_p = _abs_diff_sums(target_t, target_tk, pred_t, pred_tk)
    n = jnp.float32(target_t.size)
    m = (sum_t - sum_p) / n
    loss = m ** 2 if diff_pp else (sum_t / n - sum_p / n) ** 2
    return loss, (target_t, target_tk, pred_t, pred_tk, m)


def _pdl_bwd(diff_pp, res, g):
    del diff_pp  # both modes have the same analytic gradient
    target_t, target_tk, pred_t, pred_tk, m = res
    n = jnp.float32(target_t.size)
    coef = g * 2.0 * m / n
    sgn_t = jnp.sign(target_t.astype(jnp.float32) - target_tk.astype(jnp.float32))
    sgn_p = jnp.sign(pred_t.astype(jnp.float32) - pred_tk.astype(jnp.float32))
    return ((coef * sgn_t).astype(target_t.dtype),
            (-coef * sgn_t).astype(target_tk.dtype),
            jnp.zeros_like(pred_t),               # pred_t is detached
            (coef * sgn_p).astype(pred_tk.dtype))


_pixel_dynamics_loss.defvjp(_pdl_fwd, _pdl_bwd)


@functools.partial(jax.jit, static_argnames=("diff_pp",))
def pixel_dynamics_loss(target_t, target_tk, pred_t, pred_tk, diff_pp=False):
    # pred_t.detach() in PyTorch -> stop_gradient (forward value unchanged).
    pred_t = jax.lax.stop_gradient(pred_t)
    return _pixel_dynamics_loss(target_t, target_tk, pred_t, pred_tk, diff_pp)


def _reference(target_t, target_tk, pred_t, pred_tk, diff_pp=False):
    tt, ttk, pt, ptk = (a.astype(jnp.float32)
                        for a in (target_t, target_tk, pred_t, pred_tk))
    pt = jax.lax.stop_gradient(pt)  # mirrors .detach()
    if diff_pp:
        return (jnp.abs(tt - ttk) - jnp.abs(pt - ptk)).mean() ** 2
    return (jnp.abs(tt - ttk).mean() - jnp.abs(pt - ptk).mean()) ** 2


if __name__ == "__main__":
    key = jax.random.PRNGKey(0)
    k1, k2, k3, k4 = jax.random.split(key, 4)
    shape = (2, 4, 16, 16)  # NCHW
    target_t = jax.random.normal(k1, shape, dtype=jnp.float32)
    target_tk = jax.random.normal(k2, shape, dtype=jnp.float32)
    pred_t = jax.random.normal(k3, shape, dtype=jnp.float32)
    pred_tk = jax.random.normal(k4, shape, dtype=jnp.float32)

    ok = True

    # Forward, f32 inputs, both modes.
    for diff_pp in (False, True):
        out = jax.block_until_ready(
            pixel_dynamics_loss(target_t, target_tk, pred_t, pred_tk,
                                diff_pp=diff_pp))
        ref = _reference(target_t, target_tk, pred_t, pred_tk, diff_pp=diff_pp)
        if not jnp.allclose(out, ref, rtol=1e-5, atol=1e-6):
            ok = False
            print(f"FWD MISMATCH diff_pp={diff_pp}: kernel={out} ref={ref}")

    # Forward, bf16 inputs (native-dtype DMA, f32 accumulate in-kernel).
    bf = [a.astype(jnp.bfloat16) for a in (target_t, target_tk, pred_t, pred_tk)]
    out = jax.block_until_ready(pixel_dynamics_loss(*bf, diff_pp=False))
    ref = _reference(*bf, diff_pp=False)
    if not jnp.allclose(out, ref, rtol=1e-4, atol=1e-5):
        ok = False
        print(f"BF16 FWD MISMATCH: kernel={out} ref={ref}")

    # Gradients via the custom VJP (pallas_call is not auto-differentiable).
    grads = jax.grad(pixel_dynamics_loss, argnums=(0, 1, 2, 3))(
        target_t, target_tk, pred_t, pred_tk, diff_pp=False)
    ref_grads = jax.grad(_reference, argnums=(0, 1, 2, 3))(
        target_t, target_tk, pred_t, pred_tk, diff_pp=False)
    for gk, gr in zip(grads, ref_grads):
        gk = jax.block_until_ready(gk)
        if not jnp.allclose(gk, gr, rtol=1e-3, atol=1e-7):
            ok = False
            print("GRAD MISMATCH")

    if ok:
        print("KERNEL_OK")
</pallas_src>

<mosaic_0001>
module attributes {stable_mosaic.version = 11 : i64} {
  func.func @_pdl_partial_kernel(%arg0: i32, %arg1: memref<16x128xf32, #tpu.memory_space<vmem>>, %arg2: memref<16x128xf32, #tpu.memory_space<vmem>>, %arg3: memref<16x128xf32, #tpu.memory_space<vmem>>, %arg4: memref<16x128xf32, #tpu.memory_space<vmem>>, %arg5: memref<1x8x128xf32, #tpu.memory_space<vmem>>, %arg6: memref<1x8x128xf32, #tpu.memory_space<vmem>>) attributes {dimension_semantics = [#tpu.dimension_semantics<parallel>], iteration_bounds = array<i64: 1>, scalar_prefetch = 0 : i64, scratch_operands = 0 : i64, tpu.core_type = #tpu.core_type<tc>, window_params = [{transform_indices = @transform_0, window_bounds = array<i64: 16, 128>}, {transform_indices = @transform_1, window_bounds = array<i64: 16, 128>}, {transform_indices = @transform_2, window_bounds = array<i64: 16, 128>}, {transform_indices = @transform_3, window_bounds = array<i64: 16, 128>}, {transform_indices = @transform_4, window_bounds = array<i64: 1, 8, 128>}, {transform_indices = @transform_5, window_bounds = array<i64: 1, 8, 128>}]} {
    %c0 = arith.constant 0 : index
    %c0_0 = arith.constant 0 : index
    %0 = vector.load %arg1[%c0, %c0_0] : memref<16x128xf32, #tpu.memory_space<vmem>>, vector<16x128xf32>
    %c0_1 = arith.constant 0 : index
    %c0_2 = arith.constant 0 : index
    %1 = vector.load %arg2[%c0_1, %c0_2] : memref<16x128xf32, #tpu.memory_space<vmem>>, vector<16x128xf32>
    %2 = arith.subf %0, %1 : vector<16x128xf32>
    %3 = math.absf %2 : vector<16x128xf32>
    %c0_3 = arith.constant 0 : index
    %c0_4 = arith.constant 0 : index
    %4 = vector.load %arg3[%c0_3, %c0_4] : memref<16x128xf32, #tpu.memory_space<vmem>>, vector<16x128xf32>
    %c0_5 = arith.constant 0 : index
    %c0_6 = arith.constant 0 : index
    %5 = vector.load %arg4[%c0_5, %c0_6] : memref<16x128xf32, #tpu.memory_space<vmem>>, vector<16x128xf32>
    %6 = arith.subf %4, %5 : vector<16x128xf32>
    %7 = math.absf %6 : vector<16x128xf32>
    %8 = vector.shape_cast %3 : vector<16x128xf32> to vector<2x8x128xf32>
    %cst = arith.constant dense<0.000000e+00> : vector<8x128xf32>
    %9 = vector.multi_reduction <add>, %8, %cst [0] : vector<2x8x128xf32> to vector<8x128xf32>
    %10 = vector.shape_cast %9 : vector<8x128xf32> to vector<1x8x128xf32>
    %c0_7 = arith.constant 0 : index
    %c0_8 = arith.constant 0 : index
    %c0_9 = arith.constant 0 : index
    %11 = vector.load %arg5[%c0_7, %c0_8, %c0_9] : memref<1x8x128xf32, #tpu.memory_space<vmem>>, vector<1x8x128xf32>
    tpu.vector_store %arg5[%c0_7, %c0_8, %c0_9], %10 {strides = array<i32>} : memref<1x8x128xf32, #tpu.memory_space<vmem>>, vector<1x8x128xf32>,
    %12 = vector.shape_cast %7 : vector<16x128xf32> to vector<2x8x128xf32>
    %cst_10 = arith.constant dense<0.000000e+00> : vector<8x128xf32>
    %13 = vector.multi_reduction <add>, %12, %cst_10 [0] : vector<2x8x128xf32> to vector<8x128xf32>
    %14 = vector.shape_cast %13 : vector<8x128xf32> to vector<1x8x128xf32>
    %c0_11 = arith.constant 0 : index
    %c0_12 = arith.constant 0 : index
    %c0_13 = arith.constant 0 : index
    %15 = vector.load %arg6[%c0_11, %c0_12, %c0_13] : memref<1x8x128xf32, #tpu.memory_space<vmem>>, vector<1x8x128xf32>
    tpu.vector_store %arg6[%c0_11, %c0_12, %c0_13], %14 {strides = array<i32>} : memref<1x8x128xf32, #tpu.memory_space<vmem>>, vector<1x8x128xf32>,
    return
  }
  func.func @transform_0(%arg0: i32) -> (i32, i32) {
    %c0_i32 = arith.constant 0 : i32
    %c0_i32_0 = arith.constant 0 : i32
    return %arg0, %c0_i32 : i32, i32
  }
  func.func @transform_1(%arg0: i32) -> (i32, i32) {
    %c0_i32 = arith.constant 0 : i32
    %c0_i32_0 = arith.constant 0 : i32
    return %arg0, %c0_i32 : i32, i32
  }
  func.func @transform_2(%arg0: i32) -> (i32, i32) {
    %c0_i32 = arith.constant 0 : i32
    %c0_i32_0 = arith.constant 0 : i32
    return %arg0, %c0_i32 : i32, i32
  }
  func.func @transform_3(%arg0: i32) -> (i32, i32) {
    %c0_i32 = arith.constant 0 : i32
    %c0_i32_0 = arith.constant 0 : i32
    return %arg0, %c0_i32 : i32, i32
  }
  func.func @transform_4(%arg0: i32) -> (i32, i32, i32) {
    %c0_i32 = arith.constant 0 : i32
    %c0_i32_0 = arith.constant 0 : i32
    %c0_i32_1 = arith.constant 0 : i32
    return %arg0, %c0_i32, %c0_i32_0 : i32, i32, i32
  }
  func.func @transform_5(%arg0: i32) -> (i32, i32, i32) {
    %c0_i32 = arith.constant 0 : i32
    %c0_i32_0 = arith.constant 0 : i32
    %c0_i32_1 = arith.constant 0 : i32
    return %arg0, %c0_i32, %c0_i32_0 : i32, i32, i32
  }
}

</mosaic_0001>

<llo_original>
// kernel: pixel_dynamics_loss.1
$region0: #{pixel_dynamics_loss.1}
  #allocation0 [shape = 'u32[]', space=smem, size = 0x4, offset = 0x4, fixed_abs, tag = 'smem constant byte address 0x4 - core index']
  #allocation1 [shape = 'u32[144,128]{1,0:T(1,128)}', space=vmem, size = 0x12000, scoped, tag = 'internal scratch']
  %s0 = inlined_call_operand.vmem [shape: f32[16,128], index: 0, kind: input, shape index: {}]
  %s1 = inlined_call_operand.vmem [shape: f32[16,128], index: 1, kind: input, shape index: {}]
  %s2 = inlined_call_operand.vmem [shape: f32[16,128], index: 2, kind: input, shape index: {}]
  %s3 = inlined_call_operand.vmem [shape: f32[16,128], index: 3, kind: input, shape index: {}]
  %s4 = inlined_call_operand.vmem [shape: f32[1,8,128], index: 4, kind: output, shape index: {0}]
  %s5 = inlined_call_operand.vmem [shape: f32[1,8,128], index: 5, kind: output, shape index: {1}]
  %6 = xla_tuple %s4, %s5
  %s7 = sld [smem:[#allocation0]]
  $region34: #{pixel_dynamics_loss.1} parent=0
    _
  %s9 = ssub.s32 1, %s7
  %s10 = scalar_select 0, %s9, %s7
  // Predicated region
  $region2: #{pixel_dynamics_loss.1} parent=0 // pred_check
    _
  $region3: #{pixel_dynamics_loss.1} parent=0 // pred_check_branch
    %12 = sbr.rel (0) target = $region5
  $region4: #{pixel_dynamics_loss.1} parent=0 // pred_region
    _
  $region5: #{pixel_dynamics_loss.1} parent=0 // pred_fallthru
    _
  // Predicated region
  $region6: #{pixel_dynamics_loss.1} parent=0 // pred_check
    _
  $region7: #{pixel_dynamics_loss.1} parent=0 // pred_check_branch
    %14 = sbr.rel (0) target = $region9
  $region8: #{pixel_dynamics_loss.1} parent=0 // pred_region
    _
  $region9: #{pixel_dynamics_loss.1} parent=0 // pred_fallthru
    _
  // Predicated region
  $region10: #{pixel_dynamics_loss.1} parent=0 // pred_check
    _
  $region11: #{pixel_dynamics_loss.1} parent=0 // pred_check_branch
    %16 = sbr.rel (0) target = $region13
  $region12: #{pixel_dynamics_loss.1} parent=0 // pred_region
    _
  $region13: #{pixel_dynamics_loss.1} parent=0 // pred_fallthru
    _
  // Predicated region
  $region14: #{pixel_dynamics_loss.1} parent=0 // pred_check
    _
  $region15: #{pixel_dynamics_loss.1} parent=0 // pred_check_branch
    %18 = sbr.rel (0) target = $region17
  $region16: #{pixel_dynamics_loss.1} parent=0 // pred_region
    _
  $region17: #{pixel_dynamics_loss.1} parent=0 // pred_fallthru
    _
  %v19 = vld [vmem:[%s0] sm:$0xff]
  %v20 = vld [vmem:[%s0 + $0x8] sm:$0xff]
  %v21 = vld [vmem:[%s1] sm:$0xff]
  %v22 = vld [vmem:[%s1 + $0x8] sm:$0xff]
  %v23 = vsub.f32 %v19, %v21
  %v24 = vsub.f32 %v20, %v22
  %v25 = vand.u32 2147483647, %v23
  %v26 = vand.u32 2147483647, %v24
  %v27 = vld [vmem:[%s2] sm:$0xff]
  %v28 = vld [vmem:[%s2 + $0x8] sm:$0xff]
  %v29 = vld [vmem:[%s3] sm:$0xff]
  %v30 = vld [vmem:[%s3 + $0x8] sm:$0xff]
  %v31 = vsub.f32 %v27, %v29
  %v32 = vsub.f32 %v28, %v30
  %v33 = vand.u32 2147483647, %v31
  %v34 = vand.u32 2147483647, %v32
  %v35 = vadd.f32 %v25, %v26
  %36 = vst [vmem:[%s4] sm:$0xff] %v35
  %v37 = vadd.f32 %v33, %v34
  %38 = vst [vmem:[%s5] sm:$0xff] %v37
  // Predicated region
  $region18: #{pixel_dynamics_loss.1} parent=0 // pred_check
    _
  $region19: #{pixel_dynamics_loss.1} parent=0 // pred_check_branch
    %40 = sbr.rel (0) target = $region21
  $region20: #{pixel_dynamics_loss.1} parent=0 // pred_region
    _
  $region21: #{pixel_dynamics_loss.1} parent=0 // pred_fallthru
    _
  // Predicated region
  $region22: #{pixel_dynamics_loss.1} parent=0 // pred_check
    _
  $region23: #{pixel_dynamics_loss.1} parent=0 // pred_check_branch
    %42 = sbr.rel (0) target = $region25
  $region24: #{pixel_dynamics_loss.1} parent=0 // pred_region
    _
  $region25: #{pixel_dynamics_loss.1} parent=0 // pred_fallthru
    _
  // Predicated region
  $region26: #{pixel_dynamics_loss.1} parent=0 // pred_check
    _
  $region27: #{pixel_dynamics_loss.1} parent=0 // pred_check_branch
    %44 = sbr.rel (0) target = $region29
  $region28: #{pixel_dynamics_loss.1} parent=0 // pred_region
    _
  $region29: #{pixel_dynamics_loss.1} parent=0 // pred_fallthru
    _
  // Predicated region
  $region30: #{pixel_dynamics_loss.1} parent=0 // pred_check
    _
  $region31: #{pixel_dynamics_loss.1} parent=0 // pred_check_branch
    %46 = sbr.rel (0) target = $region33
  $region32: #{pixel_dynamics_loss.1} parent=0 // pred_region
    _
  $region33: #{pixel_dynamics_loss.1} parent=0 // pred_fallthru
    _

</llo_original>
